<compile_context>
chip_gen: v7x
topology: tpu7x:2x2x1
jax: 0.10.0
libtpu: 0.0.40
codegen_flags: <defaults>
</compile_context>

<pallas_src>
import jax
import jax.numpy as jnp
from jax.experimental import pallas as pl
from jax.experimental.pallas import tpu as pltpu


def caption_attention_kernel(cf_ref, dh_ref, mbias_ref,
                             w1b_ref, w2t_ref, b12_ref, w3b_ref,
                             expand_ref, gsum_ref, out_ref):
    # Per-grid-step shapes (one Bt-sized batch block, everything lane-dense):
    #   cf_ref     : (Bt, L*F2)   caption features, flattened over (L, F2)
    #   dh_ref     : (Bt, D)      decoder hidden
    #   mbias_ref  : (Bt, L)      additive mask bias ((mask-1)*1e10)
    #   w1b_ref    : (L*F2, L*A)  block-diag(w1)         [resident]
    #   w2t_ref    : (D,   L*A)   tile(w2, L)            [resident]
    #   b12_ref    : (1,   L*A)   tile(b1+b2, L)         [resident]
    #   w3b_ref    : (L*A, L)     block-diag(w3)         [resident]
    #   expand_ref : (L,   L*F2)  alpha lane-broadcast   [resident]
    #   gsum_ref   : (L*F2, F2)   grouped-lane sum       [resident]
    #   out_ref    : (Bt, F2)
    cf = cf_ref[...]                                                  # (Bt, L*F2)

    # att1[b, l*A+a] = cf[b, l, :] @ w1[:, a]   — single MXU matmul, no Ap pad.
    att1 = jnp.dot(cf, w1b_ref[...], preferred_element_type=jnp.float32)
    # att2[b, l*A+a] = dh[b, :] @ w2[:, a]      — broadcast over l via tiling.
    att2 = jnp.dot(dh_ref[...], w2t_ref[...], preferred_element_type=jnp.float32)

    s = jnp.tanh(att1 + att2 + b12_ref[...])                          # (Bt, L*A)

    # logits[b, l] = sum_a s[b, l*A+a] * w3[a]  — one MXU matmul (N=L).
    att = jnp.dot(s, w3b_ref[...], preferred_element_type=jnp.float32)
    att = att + mbias_ref[...]                                        # mask bias

    m = jnp.max(att, axis=-1, keepdims=True)
    e = jnp.exp(att - m)
    denom = jnp.sum(e, axis=-1, keepdims=True)
    alpha = e * pl.reciprocal(denom, approx=True)                     # (Bt, L)

    # context[b, f] = sum_l alpha[b, l] * cf[b, l, f], all in lane-dense layout:
    #   alpha_wide[b, l*F2+f] = alpha[b, l]         (tiny matmul, K=L)
    #   ctx = (alpha_wide * cf) @ gsum              (one matmul, one VPU mul)
    alpha_wide = jnp.dot(alpha, expand_ref[...],
                         preferred_element_type=jnp.float32)          # (Bt, L*F2)
    ctx = jnp.dot(alpha_wide * cf, gsum_ref[...],
                  preferred_element_type=jnp.float32)                 # (Bt, F2)

    out_ref[...] = ctx.astype(out_ref.dtype)


def _pick_batch_block(batch, max_block=512):
    """Fewer, bigger steps: whole batch in one step if it fits; otherwise the
    largest sublane-aligned divisor <= max_block."""
    if batch <= max_block:
        return batch
    divisors = [d for d in range(1, max_block + 1) if batch % d == 0]
    aligned = [d for d in divisors if d % 8 == 0]
    return max(aligned) if aligned else max(divisors)


def caption_attention(caption_features, decoder_hidden, prev_caption_mask, params,
                      *, block_b=None):
    """caption_features : (B, L, 2*Cf) f32
       decoder_hidden   : (B, D)       f32
       prev_caption_mask: (B, L)       0/1
       returns context  : (B, 2*Cf)    f32"""
    B, L, F2 = caption_features.shape
    D = decoder_hidden.shape[1]
    w1, b1, w2, b2, w3, b3 = params
    A = w1.shape[1]
    LF2, LA = L * F2, L * A
    f32 = jnp.float32

    # --- trace-time weight folding (all exact, no attention-dim padding) -----
    eyeL = jnp.eye(L, dtype=f32)
    w1_blk = jnp.kron(eyeL, w1.astype(f32))                       # (L*F2, L*A)
    w2_t = jnp.tile(w2.astype(f32), (1, L))                       # (D,   L*A)
    b12_t = jnp.tile((b1 + b2).astype(f32).reshape(1, A), (1, L))  # (1,   L*A)
    w3_blk = jnp.kron(eyeL, w3.astype(f32).reshape(A, 1))          # (L*A, L)
    # b3 dropped: constant logit shift cancels in softmax (masked lanes ~ -1e10).
    expand = jnp.kron(eyeL, jnp.ones((1, F2), f32))                # (L,   L*F2)
    gsum = jnp.kron(jnp.ones((L, 1), f32), jnp.eye(F2, dtype=f32))  # (L*F2, F2)

    cf2d = caption_features.astype(f32).reshape(B, LF2)            # free, lane-dense
    mbias = (prev_caption_mask.astype(f32) - 1.0) * jnp.float32(1e10)  # additive mask

    Bt = block_b if block_b is not None else _pick_batch_block(B)
    assert B % Bt == 0
    grid = (B // Bt,)

    grid_spec = pltpu.PrefetchScalarGridSpec(
        num_scalar_prefetch=0,
        grid=grid,
        in_specs=[
            pl.BlockSpec((Bt, LF2), lambda b: (b, 0)),   # caption features (dense)
            pl.BlockSpec((Bt, D),   lambda b: (b, 0)),   # decoder hidden
            pl.BlockSpec((Bt, L),   lambda b: (b, 0)),   # mask bias
            pl.BlockSpec((LF2, LA), lambda b: (0, 0)),   # w1 block-diag (resident)
            pl.BlockSpec((D, LA),   lambda b: (0, 0)),   # w2 tiled      (resident)
            pl.BlockSpec((1, LA),   lambda b: (0, 0)),   # b1+b2 tiled   (resident)
            pl.BlockSpec((LA, L),   lambda b: (0, 0)),   # w3 block-diag (resident)
            pl.BlockSpec((L, LF2),  lambda b: (0, 0)),   # alpha expand  (resident)
            pl.BlockSpec((LF2, F2), lambda b: (0, 0)),   # grouped sum   (resident)
        ],
        out_specs=pl.BlockSpec((Bt, F2), lambda b: (b, 0)),
    )

    return pl.pallas_call(
        caption_attention_kernel,
        out_shape=jax.ShapeDtypeStruct((B, F2), f32),
        grid_spec=grid_spec,
        compiler_params=pltpu.CompilerParams(
            dimension_semantics=("parallel",),       # splits across TCs when grid > 1
            vmem_limit_bytes=32 * 1024 * 1024,       # footprint here is < 1 MiB
        ),
    )(cf2d, decoder_hidden.astype(f32), mbias,
      w1_blk, w2_t, b12_t, w3_blk, expand, gsum)


def reference(caption_features, decoder_hidden, prev_caption_mask, params):
    """Pure-JAX reference mirroring the PyTorch forward."""
    w1, b1, w2, b2, w3, b3 = params
    att1 = caption_features @ w1 + b1                              # (B, L, A)
    att2 = decoder_hidden @ w2 + b2                                # (B, A)
    att = (jnp.tanh(att1 + att2[:, None, :]) @ w3 + b3)[..., 0]    # (B, L)
    att = jnp.where(prev_caption_mask == 0, -10000000000.0, att)
    alpha = jax.nn.softmax(att, axis=1)
    return jnp.sum(caption_features * alpha[:, :, None], axis=1)


if __name__ == "__main__":
    # Small shapes consistent with the module; whole batch fits in one grid step.
    B, L = 16, 8
    caption_features_dim = 16          # caption features have 2*Cf = 32 channels
    F2 = caption_features_dim * 2
    decoder_dim = 32
    attention_dim = 32

    key = jax.random.PRNGKey(0)
    k_cf, k_dh, k_m, k1, k2, k3, k4, k5, k6 = jax.random.split(key, 9)

    caption_features = jax.random.normal(k_cf, (B, L, F2), dtype=jnp.float32)
    decoder_hidden = jax.random.normal(k_dh, (B, decoder_dim), dtype=jnp.float32)
    # binary mask with at least one valid position per row
    prev_caption_mask = (jax.random.uniform(k_m, (B, L)) > 0.3).astype(jnp.float32)
    prev_caption_mask = prev_caption_mask.at[:, 0].set(1.0)

    # PyTorch Linear params, stored transposed as (in_features, out_features)
    scale = 0.1
    w1 = scale * jax.random.normal(k1, (F2, attention_dim), dtype=jnp.float32)
    b1 = scale * jax.random.normal(k2, (attention_dim,), dtype=jnp.float32)
    w2 = scale * jax.random.normal(k3, (decoder_dim, attention_dim), dtype=jnp.float32)
    b2 = scale * jax.random.normal(k4, (attention_dim,), dtype=jnp.float32)
    w3 = scale * jax.random.normal(k5, (attention_dim, 1), dtype=jnp.float32)
    b3 = scale * jax.random.normal(k6, (1,), dtype=jnp.float32)
    params = (w1, b1, w2, b2, w3, b3)

    out = caption_attention(caption_features, decoder_hidden, prev_caption_mask, params)
    out = jax.block_until_ready(out)

    ref = reference(caption_features, decoder_hidden, prev_caption_mask, params)
    assert out.shape == (B, F2)
    # Tolerance covers the approximate EUP reciprocal used for the softmax
    # normalization (~1e-4 relative); everything else is exact f32.
    assert jnp.allclose(out, ref, atol=2e-3, rtol=2e-3), "mismatch vs reference"

    print("KERNEL_OK")
</pallas_src>

<mosaic_0001>
module attributes {stable_mosaic.version = 11 : i64} {
  func.func @caption_attention_kernel(%arg0: i32, %arg1: memref<16x256xf32, #tpu.memory_space<vmem>>, %arg2: memref<16x32xf32, #tpu.memory_space<vmem>>, %arg3: memref<16x8xf32, #tpu.memory_space<vmem>>, %arg4: memref<256x256xf32, #tpu.memory_space<vmem>>, %arg5: memref<32x256xf32, #tpu.memory_space<vmem>>, %arg6: memref<1x256xf32, #tpu.memory_space<vmem>>, %arg7: memref<256x8xf32, #tpu.memory_space<vmem>>, %arg8: memref<8x256xf32, #tpu.memory_space<vmem>>, %arg9: memref<256x32xf32, #tpu.memory_space<vmem>>, %arg10: memref<16x32xf32, #tpu.memory_space<vmem>>) attributes {dimension_semantics = [#tpu.dimension_semantics<parallel>], iteration_bounds = array<i64: 1>, scalar_prefetch = 0 : i64, scratch_operands = 0 : i64, tpu.core_type = #tpu.core_type<tc>, window_params = [{transform_indices = @transform_0, window_bounds = array<i64: 16, 256>}, {transform_indices = @transform_1, window_bounds = array<i64: 16, 32>}, {transform_indices = @transform_2, window_bounds = array<i64: 16, 8>}, {pipeline_mode = #tpu.pipeline_mode<synchronous>, transform_indices = @transform_3, window_bounds = array<i64: 256, 256>}, {pipeline_mode = #tpu.pipeline_mode<synchronous>, transform_indices = @transform_4, window_bounds = array<i64: 32, 256>}, {pipeline_mode = #tpu.pipeline_mode<synchronous>, transform_indices = @transform_5, window_bounds = array<i64: 1, 256>}, {pipeline_mode = #tpu.pipeline_mode<synchronous>, transform_indices = @transform_6, window_bounds = array<i64: 256, 8>}, {pipeline_mode = #tpu.pipeline_mode<synchronous>, transform_indices = @transform_7, window_bounds = array<i64: 8, 256>}, {pipeline_mode = #tpu.pipeline_mode<synchronous>, transform_indices = @transform_8, window_bounds = array<i64: 256, 32>}, {transform_indices = @transform_9, window_bounds = array<i64: 16, 32>}]} {
    %c0 = arith.constant 0 : index
    %c0_0 = arith.constant 0 : index
    %0 = vector.load %arg1[%c0, %c0_0] : memref<16x256xf32, #tpu.memory_space<vmem>>, vector<16x256xf32>
    %c0_1 = arith.constant 0 : index
    %c0_2 = arith.constant 0 : index
    %1 = vector.load %arg4[%c0_1, %c0_2] : memref<256x256xf32, #tpu.memory_space<vmem>>, vector<256x256xf32>
    %cst = arith.constant dense<0.000000e+00> : vector<16x256xf32>
    %2 = tpu.matmul %0, %1, %cst {dimension_numbers = #tpu.dot_dimension_numbers<[1], [0], [0], [1], [0, 0, 1, 1], [], []>} : vector<16x256xf32>, vector<256x256xf32>, vector<16x256xf32> -> vector<16x256xf32>
    %c0_3 = arith.constant 0 : index
    %c0_4 = arith.constant 0 : index
    %3 = vector.load %arg2[%c0_3, %c0_4] : memref<16x32xf32, #tpu.memory_space<vmem>>, vector<16x32xf32>
    %c0_5 = arith.constant 0 : index
    %c0_6 = arith.constant 0 : index
    %4 = vector.load %arg5[%c0_5, %c0_6] : memref<32x256xf32, #tpu.memory_space<vmem>>, vector<32x256xf32>
    %cst_7 = arith.constant dense<0.000000e+00> : vector<16x256xf32>
    %5 = tpu.matmul %3, %4, %cst_7 {dimension_numbers = #tpu.dot_dimension_numbers<[1], [0], [0], [1], [0, 0, 1, 1], [], []>} : vector<16x32xf32>, vector<32x256xf32>, vector<16x256xf32> -> vector<16x256xf32>
    %6 = arith.addf %2, %5 : vector<16x256xf32>
    %c0_8 = arith.constant 0 : index
    %c0_9 = arith.constant 0 : index
    %7 = vector.load %arg6[%c0_8, %c0_9] : memref<1x256xf32, #tpu.memory_space<vmem>>, vector<1x256xf32>
    %8 = vector.broadcast %7 : vector<1x256xf32> to vector<16x256xf32>
    %9 = arith.addf %6, %8 : vector<16x256xf32>
    %10 = math.tanh %9 : vector<16x256xf32>
    %c0_10 = arith.constant 0 : index
    %c0_11 = arith.constant 0 : index
    %11 = vector.load %arg7[%c0_10, %c0_11] : memref<256x8xf32, #tpu.memory_space<vmem>>, vector<256x8xf32>
    %cst_12 = arith.constant dense<0.000000e+00> : vector<16x8xf32>
    %12 = tpu.matmul %10, %11, %cst_12 {dimension_numbers = #tpu.dot_dimension_numbers<[1], [0], [0], [1], [0, 0, 1, 1], [], []>} : vector<16x256xf32>, vector<256x8xf32>, vector<16x8xf32> -> vector<16x8xf32>
    %c0_13 = arith.constant 0 : index
    %c0_14 = arith.constant 0 : index
    %13 = vector.load %arg3[%c0_13, %c0_14] : memref<16x8xf32, #tpu.memory_space<vmem>>, vector<16x8xf32>
    %14 = arith.addf %12, %13 : vector<16x8xf32>
    %cst_15 = arith.constant dense<0xFF800000> : vector<16xf32>
    %15 = vector.multi_reduction <maximumf>, %14, %cst_15 [1] : vector<16x8xf32> to vector<16xf32>
    %16 = vector.shape_cast %15 : vector<16xf32> to vector<16x1xf32>
    %17 = vector.broadcast %16 : vector<16x1xf32> to vector<16x8xf32>
    %18 = arith.subf %14, %17 : vector<16x8xf32>
    %19 = math.exp %18 : vector<16x8xf32>
    %cst_16 = arith.constant dense<0.000000e+00> : vector<16xf32>
    %20 = vector.multi_reduction <add>, %19, %cst_16 [1] : vector<16x8xf32> to vector<16xf32>
    %21 = vector.shape_cast %20 : vector<16xf32> to vector<16x1xf32>
    %22 = tpu.reciprocal %21 {approx = true} : vector<16x1xf32> -> vector<16x1xf32>
    %23 = vector.broadcast %22 : vector<16x1xf32> to vector<16x8xf32>
    %24 = arith.mulf %19, %23 : vector<16x8xf32>
    %c0_17 = arith.constant 0 : index
    %c0_18 = arith.constant 0 : index
    %25 = vector.load %arg8[%c0_17, %c0_18] : memref<8x256xf32, #tpu.memory_space<vmem>>, vector<8x256xf32>
    %cst_19 = arith.constant dense<0.000000e+00> : vector<16x256xf32>
    %26 = tpu.matmul %24, %25, %cst_19 {dimension_numbers = #tpu.dot_dimension_numbers<[1], [0], [0], [1], [0, 0, 1, 1], [], []>} : vector<16x8xf32>, vector<8x256xf32>, vector<16x256xf32> -> vector<16x256xf32>
    %27 = arith.mulf %26, %0 : vector<16x256xf32>
    %c0_20 = arith.constant 0 : index
    %c0_21 = arith.constant 0 : index
    %28 = vector.load %arg9[%c0_20, %c0_21] : memref<256x32xf32, #tpu.memory_space<vmem>>, vector<256x32xf32>
    %cst_22 = arith.constant dense<0.000000e+00> : vector<16x32xf32>
    %29 = tpu.matmul %27, %28, %cst_22 {dimension_numbers = #tpu.dot_dimension_numbers<[1], [0], [0], [1], [0, 0, 1, 1], [], []>} : vector<16x256xf32>, vector<256x32xf32>, vector<16x32xf32> -> vector<16x32xf32>
    %c0_23 = arith.constant 0 : index
    %c0_24 = arith.constant 0 : index
    %30 = vector.load %arg10[%c0_23, %c0_24] : memref<16x32xf32, #tpu.memory_space<vmem>>, vector<16x32xf32>
    tpu.vector_store %arg10[%c0_23, %c0_24], %29 {strides = array<i32>} : memref<16x32xf32, #tpu.memory_space<vmem>>, vector<16x32xf32>,
    return
  }
  func.func @transform_0(%arg0: i32) -> (i32, i32) {
    %c0_i32 = arith.constant 0 : i32
    %c0_i32_0 = arith.constant 0 : i32
    return %arg0, %c0_i32 : i32, i32
  }
  func.func @transform_1(%arg0: i32) -> (i32, i32) {
    %c0_i32 = arith.constant 0 : i32
    %c0_i32_0 = arith.constant 0 : i32
    return %arg0, %c0_i32 : i32, i32
  }
  func.func @transform_2(%arg0: i32) -> (i32, i32) {
    %c0_i32 = arith.constant 0 : i32
    %c0_i32_0 = arith.constant 0 : i32
    return %arg0, %c0_i32 : i32, i32
  }
  func.func @transform_3(%arg0: i32) -> (i32, i32) {
    %c0_i32 = arith.constant 0 : i32
    %c0_i32_0 = arith.constant 0 : i32
    %c0_i32_1 = arith.constant 0 : i32
    return %c0_i32, %c0_i32_0 : i32, i32
  }
  func.func @transform_4(%arg0: i32) -> (i32, i32) {
    %c0_i32 = arith.constant 0 : i32
    %c0_i32_0 = arith.constant 0 : i32
    %c0_i32_1 = arith.constant 0 : i32
    return %c0_i32, %c0_i32_0 : i32, i32
  }
  func.func @transform_5(%arg0: i32) -> (i32, i32) {
    %c0_i32 = arith.constant 0 : i32
    %c0_i32_0 = arith.constant 0 : i32
    %c0_i32_1 = arith.constant 0 : i32
    return %c0_i32, %c0_i32_0 : i32, i32
  }
  func.func @transform_6(%arg0: i32) -> (i32, i32) {
    %c0_i32 = arith.constant 0 : i32
    %c0_i32_0 = arith.constant 0 : i32
    %c0_i32_1 = arith.constant 0 : i32
    return %c0_i32, %c0_i32_0 : i32, i32
  }
  func.func @transform_7(%arg0: i32) -> (i32, i32) {
    %c0_i32 = arith.constant 0 : i32
    %c0_i32_0 = arith.constant 0 : i32
    %c0_i32_1 = arith.constant 0 : i32
    return %c0_i32, %c0_i32_0 : i32, i32
  }
  func.func @transform_8(%arg0: i32) -> (i32, i32) {
    %c0_i32 = arith.constant 0 : i32
    %c0_i32_0 = arith.constant 0 : i32
    %c0_i32_1 = arith.constant 0 : i32
    return %c0_i32, %c0_i32_0 : i32, i32
  }
  func.func @transform_9(%arg0: i32) -> (i32, i32) {
    %c0_i32 = arith.constant 0 : i32
    %c0_i32_0 = arith.constant 0 : i32
    return %arg0, %c0_i32 : i32, i32
  }
}

</mosaic_0001>

<llo_original>
// kernel: tpu_custom_call.1
$region0: #{tpu_custom_call.1}
  #allocation0 [shape = 'u32[]', space=smem, size = 0x4, offset = 0x4, fixed_abs, tag = 'smem constant byte address 0x4 - core index']
  #allocation1 [shape = 'u32[144,128]{1,0:T(1,128)}', space=vmem, size = 0x12000, scoped, tag = 'internal scratch']
  %s0 = inlined_call_operand.vmem [shape: f32[16,256], index: 0, kind: input, shape index: {}]
  %s1 = inlined_call_operand.vmem [shape: f32[16,32], index: 1, kind: input, shape index: {}]
  %s2 = inlined_call_operand.vmem [shape: f32[16,8], index: 2, kind: input, shape index: {}]
  %s3 = inlined_call_operand.vmem [shape: f32[256,256], index: 3, kind: input, shape index: {}]
  %s4 = inlined_call_operand.hbm [shape: f32[32,256], index: 4, kind: input, shape index: {}]
  %s5 = inlined_call_operand.vmem [shape: f32[1,256], index: 5, kind: input, shape index: {}]
  %s6 = inlined_call_operand.vmem [shape: f32[256,8], index: 6, kind: input, shape index: {}]
  %s7 = inlined_call_operand.hbm [shape: f32[8,256], index: 7, kind: input, shape index: {}]
  %s8 = inlined_call_operand.vmem [shape: f32[256,32], index: 8, kind: input, shape index: {}]
  %s9 = inlined_call_operand.hbm [shape: f32[16,32], index: 9, kind: output, shape index: {}]
  %s10 = sld [smem:[#allocation0]]
  $region54: #{tpu_custom_call.1} parent=0
    _
  %s12 = ssub.s32 1, %s10
  %s13 = scalar_select 0, %s12, %s10
  $region1: #{tpu_custom_call.1} parent=0
    #allocation2 [shape = 'u8[32768]{0}', space=vmem, size = 0x8000, scoped, tag = 'input window, operand 4, single buffered']
    #allocation3 [shape = 's32[1]{0}', space=sflag, size = 0x4, scoped, tag = 'scoped memory for tpu_custom_call.1']
    #allocation4 [shape = 's32[1]{0}', space=sflag, size = 0x4, scoped, tag = 'scoped memory for tpu_custom_call.1']
    #allocation5 [shape = 'u8[8192]{0}', space=vmem, size = 0x2000, scoped, tag = 'input window, operand 7, single buffered']
    #allocation6 [shape = 's32[1]{0}', space=sflag, size = 0x4, scoped, tag = 'scoped memory for tpu_custom_call.1']
    #allocation7 [shape = 'u8[8192]{0}', space=vmem, size = 0x2000, scoped, tag = 'output window, operand 0, single buffered']
    %14 = vsyncpa [#allocation3], 0
    %15 = vsyncpa [#allocation6], 0
    %16 = vsyncpa [#allocation4], 0
    // Predicated region
    $region2: #{tpu_custom_call.1} parent=1 // pred_check
      _
    $region3: #{tpu_custom_call.1} parent=1 // pred_check_branch
      %18 = sbr.rel (0) target = $region5
    $region4: #{tpu_custom_call.1} parent=1 // pred_region
      _
    $region5: #{tpu_custom_call.1} parent=1 // pred_fallthru
      _
    // Predicated region
    $region6: #{tpu_custom_call.1} parent=1 // pred_check
      _
    $region7: #{tpu_custom_call.1} parent=1 // pred_check_branch
      %20 = sbr.rel (0) target = $region9
    $region8: #{tpu_custom_call.1} parent=1 // pred_region
      _
    $region9: #{tpu_custom_call.1} parent=1 // pred_fallthru
      _
    // Predicated region
    $region10: #{tpu_custom_call.1} parent=1 // pred_check
      _
    $region11: #{tpu_custom_call.1} parent=1 // pred_check_branch
      %22 = sbr.rel (0) target = $region13
    $region12: #{tpu_custom_call.1} parent=1 // pred_region
      _
    $region13: #{tpu_custom_call.1} parent=1 // pred_fallthru
      _
    // Predicated region
    $region14: #{tpu_custom_call.1} parent=1 // pred_check
      _
    $region15: #{tpu_custom_call.1} parent=1 // pred_check_branch
      %24 = sbr.rel (0) target = $region17
    $region16: #{tpu_custom_call.1} parent=1 // pred_region
      _
    $region17: #{tpu_custom_call.1} parent=1 // pred_fallthru
      _
    // Predicated region
    $region18: #{tpu_custom_call.1} parent=1 // pred_check
      _
    $region19: #{tpu_custom_call.1} parent=1 // pred_check_branch
      %26 = sbr.rel (0) target = $region21
    $region20: #{tpu_custom_call.1} parent=1 // pred_region
      %s28 = ssub.s32 1024, 1024
      %29 = vsyncadd [#allocation3], %s28
      %s30 = sshll.u32 [#allocation2], 4
      %s31 = int_to_ptr.vmem [resolvable:$true] %s30
      %36 = dma.hbm_to_vmem [thread:$0]  %s4, 1024, %s31, [#allocation3], 256, 256, 16
    $region21: #{tpu_custom_call.1} parent=1 // pred_fallthru
      _
    // Predicated region
    $region22: #{tpu_custom_call.1} parent=1 // pred_check
      _
    $region23: #{tpu_custom_call.1} parent=1 // pred_check_branch
      %38 = sbr.rel (0) target = $region25
    $region24: #{tpu_custom_call.1} parent=1 // pred_region
      _
    $region25: #{tpu_custom_call.1} parent=1 // pred_fallthru
      _
    // Predicated region
    $region26: #{tpu_custom_call.1} parent=1 // pred_check
      _
    $region27: #{tpu_custom_call.1} parent=1 // pred_check_branch
      %40 = sbr.rel (0) target = $region29
    $region28: #{tpu_custom_call.1} parent=1 // pred_region
      _
    $region29: #{tpu_custom_call.1} parent=1 // pred_fallthru
      _
    // Predicated region
    $region30: #{tpu_custom_call.1} parent=1 // pred_check
      _
    $region31: #{tpu_custom_call.1} parent=1 // pred_check_branch
      %42 = sbr.rel (0) target = $region33
    $region32: #{tpu_custom_call.1} parent=1 // pred_region
      %s44 = ssub.s32 256, 256
      %45 = vsyncadd [#allocation6], %s44
      %s47 = sshll.u32 [#allocation5], 4
      %s48 = int_to_ptr.vmem [resolvable:$true] %s47
      %50 = dma.hbm_to_vmem [thread:$0]  %s7, 256, %s48, [#allocation6]
    $region33: #{tpu_custom_call.1} parent=1 // pred_fallthru
      _
    // Predicated region
    $region34: #{tpu_custom_call.1} parent=1 // pred_check
      _
    $region35: #{tpu_custom_call.1} parent=1 // pred_check_branch
      %52 = sbr.rel (0) target = $region37
    $region36: #{tpu_custom_call.1} parent=1 // pred_region
      _
    $region37: #{tpu_custom_call.1} parent=1 // pred_fallthru
      _
    // Predicated region
    $region38: #{tpu_custom_call.1} parent=1 // pred_check
      _
    $region39: #{tpu_custom_call.1} parent=1 // pred_check_branch
      %54 = sbr.rel (0) target = $region41
    $region40: #{tpu_custom_call.1} parent=1 // pred_region
      %55 = dma.done [#allocation3], 1024
    $region41: #{tpu_custom_call.1} parent=1 // pred_fallthru
      _
    // Predicated region
    $region42: #{tpu_custom_call.1} parent=1 // pred_check
      _
    $region43: #{tpu_custom_call.1} parent=1 // pred_check_branch
      %57 = sbr.rel (0) target = $region45
    $region44: #{tpu_custom_call.1} parent=1 // pred_region
      %58 = dma.done [#allocation6], 256
    $region45: #{tpu_custom_call.1} parent=1 // pred_fallthru
      _
    %v59 = vld [vmem:[%s0] sm:$0xff]
    %v60 = vld [vmem:[%s0 + $0x8] sm:$0xff]
    %v61 = vld [vmem:[%s0 + $0x10] sm:$0xff]
    %v62 = vld [vmem:[%s0 + $0x18] sm:$0xff]
    %v63 = vld [vmem:[%s3] sm:$0xff]
    %v64 = vld [vmem:[%s3 + $0x8] sm:$0xff]
    %v65 = vld [vmem:[%s3 + $0x10] sm:$0xff]
    %v66 = vld [vmem:[%s3 + $0x18] sm:$0xff]
    %v67 = vld [vmem:[%s3 + $0x20] sm:$0xff]
    %v68 = vld [vmem:[%s3 + $0x28] sm:$0xff]
    %v69 = vld [vmem:[%s3 + $0x30] sm:$0xff]
    %v70 = vld [vmem:[%s3 + $0x38] sm:$0xff]
    %v71 = vld [vmem:[%s3 + $0x40] sm:$0xff]
    %v72 = vld [vmem:[%s3 + $0x48] sm:$0xff]
    %v73 = vld [vmem:[%s3 + $0x50] sm:$0xff]
    %v74 = vld [vmem:[%s3 + $0x58] sm:$0xff]
    %v75 = vld [vmem:[%s3 + $0x60] sm:$0xff]
    %v76 = vld [vmem:[%s3 + $0x68] sm:$0xff]
    %v77 = vld [vmem:[%s3 + $0x70] sm:$0xff]
    %v78 = vld [vmem:[%s3 + $0x78] sm:$0xff]
    %v79 = vld [vmem:[%s3 + $0x80] sm:$0xff]
    %v80 = vld [vmem:[%s3 + $0x88] sm:$0xff]
    %v81 = vld [vmem:[%s3 + $0x90] sm:$0xff]
    %v82 = vld [vmem:[%s3 + $0x98] sm:$0xff]
    %v83 = vld [vmem:[%s3 + $0xa0] sm:$0xff]
    %v84 = vld [vmem:[%s3 + $0xa8] sm:$0xff]
    %v85 = vld [vmem:[%s3 + $0xb0] sm:$0xff]
    %v86 = vld [vmem:[%s3 + $0xb8] sm:$0xff]
    %v87 = vld [vmem:[%s3 + $0xc0] sm:$0xff]
    %v88 = vld [vmem:[%s3 + $0xc8] sm:$0xff]
    %v89 = vld [vmem:[%s3 + $0xd0] sm:$0xff]
    %v90 = vld [vmem:[%s3 + $0xd8] sm:$0xff]
    %v91 = vld [vmem:[%s3 + $0xe0] sm:$0xff]
    %v92 = vld [vmem:[%s3 + $0xe8] sm:$0xff]
    %v93 = vld [vmem:[%s3 + $0xf0] sm:$0xff]
    %v94 = vld [vmem:[%s3 + $0xf8] sm:$0xff]
    %v95 = vld [vmem:[%s3 + $0x100] sm:$0xff]
    %v96 = vld [vmem:[%s3 + $0x108] sm:$0xff]
    %v97 = vld [vmem:[%s3 + $0x110] sm:$0xff]
    %v98 = vld [vmem:[%s3 + $0x118] sm:$0xff]
    %v99 = vld [vmem:[%s3 + $0x120] sm:$0xff]
    %v100 = vld [vmem:[%s3 + $0x128] sm:$0xff]
    %v101 = vld [vmem:[%s3 + $0x130] sm:$0xff]
    %v102 = vld [vmem:[%s3 + $0x138] sm:$0xff]
    %v103 = vld [vmem:[%s3 + $0x140] sm:$0xff]
    %v104 = vld [vmem:[%s3 + $0x148] sm:$0xff]
    %v105 = vld [vmem:[%s3 + $0x150] sm:$0xff]
    %v106 = vld [vmem:[%s3 + $0x158] sm:$0xff]
    %v107 = vld [vmem:[%s3 + $0x160] sm:$0xff]
    %v108 = vld [vmem:[%s3 + $0x168] sm:$0xff]
    %v109 = vld [vmem:[%s3 + $0x170] sm:$0xff]
    %v110 = vld [vmem:[%s3 + $0x178] sm:$0xff]
    %v111 = vld [vmem:[%s3 + $0x180] sm:$0xff]
    %v112 = vld [vmem:[%s3 + $0x188] sm:$0xff]
    %v113 = vld [vmem:[%s3 + $0x190] sm:$0xff]
    %v114 = vld [vmem:[%s3 + $0x198] sm:$0xff]
    %v115 = vld [vmem:[%s3 + $0x1a0] sm:$0xff]
    %v116 = vld [vmem:[%s3 + $0x1a8] sm:$0xff]
    %v117 = vld [vmem:[%s3 + $0x1b0] sm:$0xff]
    %v118 = vld [vmem:[%s3 + $0x1b8] sm:$0xff]
    %v119 = vld [vmem:[%s3 + $0x1c0] sm:$0xff]
    %v120 = vld [vmem:[%s3 + $0x1c8] sm:$0xff]
    %v121 = vld [vmem:[%s3 + $0x1d0] sm:$0xff]
    %v122 = vld [vmem:[%s3 + $0x1d8] sm:$0xff]
    %v123 = vld [vmem:[%s3 + $0x1e0] sm:$0xff]
    %v124 = vld [vmem:[%s3 + $0x1e8] sm:$0xff]
    %v125 = vld [vmem:[%s3 + $0x1f0] sm:$0xff]
    %v126 = vld [vmem:[%s3 + $0x1f8] sm:$0xff]
    %v127 = vld [vmem:[%s1] sm:$0xff]
    %v128 = vld [vmem:[%s1 + $0x8] sm:$0xff]
    %v129 = vld [vmem:[#allocation2] sm:$0xff]
    %v130 = vld [vmem:[#allocation2 + $0x8] sm:$0xff]
    %v131 = vld [vmem:[#allocation2 + $0x10] sm:$0xff]
    %v132 = vld [vmem:[#allocation2 + $0x18] sm:$0xff]
    %v133 = vld [vmem:[#allocation2 + $0x20] sm:$0xff]
    %v134 = vld [vmem:[#allocation2 + $0x28] sm:$0xff]
    %v135 = vld [vmem:[#allocation2 + $0x30] sm:$0xff]
    %v136 = vld [vmem:[#allocation2 + $0x38] sm:$0xff]
    %vm137 = vcmask 261120
    %v139 = vsel %vm137, %v127, 0
    %v142 = vsel %vm137, %v128, 0
    %144 = vmatprep.subr.mxu0 %v130
    %145 = vmatpush1.msra.mxu0 %v129
    %146 = vmatprep.subr.mxu0 %v132
    %147 = vmatpush1.msra.mxu0 %v131
    %148 = vmatprep.subr.mxu0 %v134
    %149 = vmatpush1.msra.mxu0 %v133
    %150 = vmatprep.subr.mxu0 %v136
    %151 = vmatpush1.msra.mxu0 %v135
    %152 = vmatprep.subr.mxu0 0.0
    %153 = vmatpush1.msra.mxu0 0.0
    %154 = vmatprep.subr.mxu0 0.0
    %155 = vmatpush1.msra.mxu0 0.0
    %156 = vmatprep.subr.mxu0 0.0
    %157 = vmatpush1.msra.mxu0 0.0
    %158 = vmatprep.subr.mxu0 0.0
    %159 = vmatpush1.msra.mxu0 0.0
    %160 = vmatprep.subr.mxu0 0.0
    %161 = vmatpush1.msra.mxu0 0.0
    %162 = vmatprep.subr.mxu0 0.0
    %163 = vmatpush1.msra.mxu0 0.0
    %164 = vmatprep.subr.mxu0 0.0
    %165 = vmatpush1.msra.mxu0 0.0
    %166 = vmatprep.subr.mxu0 0.0
    %167 = vmatpush1.msra.mxu0 0.0
    %168 = vmatprep.subr.mxu0 0.0
    %169 = vmatpush1.msra.mxu0 0.0
    %170 = vmatprep.subr.mxu0 0.0
    %171 = vmatpush1.msra.mxu0 0.0
    %172 = vmatprep.subr.mxu0 0.0
    %173 = vmatpush1.msra.mxu0 0.0
    %174 = vmatprep.subr.mxu0 0.0
    %175 = vmatpush1.msra.mxu0 0.0
    %176 = vmatprep.subr.mxu0 0.0
    %177 = vmatpush1.msra.mxu0 0.0
    %178 = vmatprep.subr.mxu0 0.0
    %179 = vmatpush1.msra.mxu0 0.0
    %180 = vmatprep.subr.mxu0 0.0
    %181 = vmatpush1.msra.mxu0 0.0
    %182 = vmatprep.subr.mxu0 0.0
    %183 = vmatpush1.msra.mxu0 0.0
    %184 = vmatprep.subr.mxu0 0.0
    %185 = vmatpush1.msra.mxu0 0.0
    %186 = vmatprep.subr.mxu0 0.0
    %187 = vmatpush1.msra.mxu0 0.0
    %188 = vmatprep.subr.mxu0 0.0
    %189 = vmatpush1.msra.mxu0 0.0
    %190 = vmatprep.subr.mxu0 0.0
    %191 = vmatpush1.msra.mxu0 0.0
    %192 = vmatprep.subr.mxu0 0.0
    %193 = vmatpush1.msra.mxu0 0.0
    %194 = vmatprep.subr.mxu0 0.0
    %195 = vmatpush1.msra.mxu0 0.0
    %196 = vmatprep.subr.mxu0 0.0
    %197 = vmatpush1.msra.mxu0 0.0
    %198 = vmatprep.subr.mxu0 0.0
    %199 = vmatpush1.msra.mxu0 0.0
    %200 = vmatprep.subr.mxu0 0.0
    %201 = vmatpush1.msra.mxu0 0.0
    %202 = vmatprep.subr.mxu0 0.0
    %203 = vmatpush1.msra.mxu0 0.0
    %204 = vmatprep.subr.mxu0 0.0
    %205 = vmatpush1.msra.mxu0 0.0
    %206 = vmatprep.subr.mxu0 0.0
    %207 = vmatpush1.msra.mxu0 0.0
    %208 = vmatprep.mubr.f32.mxu0 0.0
    %209 = vmatmul.mubr.f32.gmra.mrb[0].mxu0 %v139
    %v210 = vpop.f32.mrb[0].mxu0
    %v211 = vadd.f32 0.0, %v210
    %v212 = vpop.f32.mrb[0].mxu0
    %v213 = vadd.f32 0.0, %v212
    %214 = vmatprep.mubr.f32.mxu0 0.0
    %215 = vmatmul.mubr.f32.gmra.mrb[0].mxu0 %v142
    %v216 = vpop.f32.mrb[0].mxu0
    %v217 = vadd.f32 0.0, %v216
    %v218 = vpop.f32.mrb[0].mxu0
    %v219 = vadd.f32 0.0, %v218
    %220 = vdwg.mxu0
    %221 = vmatprep.subr.mxu0 %v64
    %222 = vmatpush1.msra.mxu0 %v63
    %223 = vmatprep.subr.mxu0 %v66
    %224 = vmatpush1.msra.mxu0 %v65
    %225 = vmatprep.subr.mxu0 %v68
    %226 = vmatpush1.msra.mxu0 %v67
    %227 = vmatprep.subr.mxu0 %v70
    %228 = vmatpush1.msra.mxu0 %v69
    %229 = vmatprep.subr.mxu0 %v72
    %230 = vmatpush1.msra.mxu0 %v71
    %231 = vmatprep.subr.mxu0 %v74
    %232 = vmatpush1.msra.mxu0 %v73
    %233 = vmatprep.subr.mxu0 %v76
    %234 = vmatpush1.msra.mxu0 %v75
    %235 = vmatprep.subr.mxu0 %v78
    %236 = vmatpush1.msra.mxu0 %v77
    %237 = vmatprep.subr.mxu0 %v80
    %238 = vmatpush1.msra.mxu0 %v79
    %239 = vmatprep.subr.mxu0 %v82
    %240 = vmatpush1.msra.mxu0 %v81
    %241 = vmatprep.subr.mxu0 %v84
    %242 = vmatpush1.msra.mxu0 %v83
    %243 = vmatprep.subr.mxu0 %v86
    %244 = vmatpush1.msra.mxu0 %v85
    %245 = vmatprep.subr.mxu0 %v88
    %246 = vmatpush1.msra.mxu0 %v87
    %247 = vmatprep.subr.mxu0 %v90
    %248 = vmatpush1.msra.mxu0 %v89
    %249 = vmatprep.subr.mxu0 %v92
    %250 = vmatpush1.msra.mxu0 %v91
    %251 = vmatprep.subr.mxu0 %v94
    %252 = vmatpush1.msra.mxu0 %v93
    %253 = vmatprep.subr.mxu0 %v96
    %254 = vmatpush1.msra.mxu0 %v95
    %255 = vmatprep.subr.mxu0 %v98
    %256 = vmatpush1.msra.mxu0 %v97
    %257 = vmatprep.subr.mxu0 %v100
    %258 = vmatpush1.msra.mxu0 %v99
    %259 = vmatprep.subr.mxu0 %v102
    %260 = vmatpush1.msra.mxu0 %v101
    %261 = vmatprep.subr.mxu0 %v104
    %262 = vmatpush1.msra.mxu0 %v103
    %263 = vmatprep.subr.mxu0 %v106
    %264 = vmatpush1.msra.mxu0 %v105
    %265 = vmatprep.subr.mxu0 %v108
    %266 = vmatpush1.msra.mxu0 %v107
    %267 = vmatprep.subr.mxu0 %v110
    %268 = vmatpush1.msra.mxu0 %v109
    %269 = vmatprep.subr.mxu0 %v112
    %270 = vmatpush1.msra.mxu0 %v111
    %271 = vmatprep.subr.mxu0 %v114
    %272 = vmatpush1.msra.mxu0 %v113
    %273 = vmatprep.subr.mxu0 %v116
    %274 = vmatpush1.msra.mxu0 %v115
    %275 = vmatprep.subr.mxu0 %v118
    %276 = vmatpush1.msra.mxu0 %v117
    %277 = vmatprep.subr.mxu0 %v120
    %278 = vmatpush1.msra.mxu0 %v119
    %279 = vmatprep.subr.mxu0 %v122
    %280 = vmatpush1.msra.mxu0 %v121
    %281 = vmatprep.subr.mxu0 %v124
    %282 = vmatpush1.msra.mxu0 %v123
    %283 = vmatprep.subr.mxu0 %v126
    %284 = vmatpush1.msra.mxu0 %v125
    %285 = vmatprep.mubr.f32.mxu0 %v60
    %286 = vmatmul.mubr.f32.gmra.mrb[0].mxu0 %v59
    %v287 = vpop.f32.mrb[0].mxu0
    %v288 = vadd.f32 %v211, %v287
    %v289 = vpop.f32.mrb[0].mxu0
    %v290 = vadd.f32 %v213, %v289
    %291 = vmatprep.mubr.f32.mxu0 %v62
    %292 = vmatmul.mubr.f32.gmra.mrb[0].mxu0 %v61
    %v293 = vpop.f32.mrb[0].mxu0
    %v294 = vadd.f32 %v217, %v293
    %v295 = vpop.f32.mrb[0].mxu0
    %v296 = vadd.f32 %v219, %v295
    %297 = vdwg.mxu0
    %v298 = vld [vmem:[%s5] sm:$0x3]
    %v300 = vlaneseq
    %v301 = vshrl.u32 %v300, 7
    %v302 = vsub.s32 0, %v301
    %v303 = vrot.slane %v298, %v302
    %v304 = vlaneseq
    %v305 = vshrl.u32 %v304, 7
    %v306 = vsub.s32 1, %v305
    %v307 = vrot.slane %v298, %v306
    %v310 = vadd.f32 %v288, %v303
    %v311 = vadd.f32 %v290, %v307
    %v312 = vadd.f32 %v294, %v303
    %v313 = vadd.f32 %v296, %v307
    %v314 = vtanh.pop %v310
    %v315 = vtanh.pop %v311
    %v316 = vtanh.pop %v312
    %v317 = vtanh.pop %v313
    %v318 = vld [vmem:[%s6] sm:$0xff]
    %v319 = vld [vmem:[%s6 + $0x8] sm:$0xff]
    %v320 = vld [vmem:[%s6 + $0x10] sm:$0xff]
    %v321 = vld [vmem:[%s6 + $0x18] sm:$0xff]
    %v322 = vld [vmem:[%s6 + $0x20] sm:$0xff]
    %v323 = vld [vmem:[%s6 + $0x28] sm:$0xff]
    %v324 = vld [vmem:[%s6 + $0x30] sm:$0xff]
    %v325 = vld [vmem:[%s6 + $0x38] sm:$0xff]
    %v326 = vld [vmem:[%s6 + $0x40] sm:$0xff]
    %v327 = vld [vmem:[%s6 + $0x48] sm:$0xff]
    %v328 = vld [vmem:[%s6 + $0x50] sm:$0xff]
    %v329 = vld [vmem:[%s6 + $0x58] sm:$0xff]
    %v330 = vld [vmem:[%s6 + $0x60] sm:$0xff]
    %v331 = vld [vmem:[%s6 + $0x68] sm:$0xff]
    %v332 = vld [vmem:[%s6 + $0x70] sm:$0xff]
    %v333 = vld [vmem:[%s6 + $0x78] sm:$0xff]
    %v334 = vld [vmem:[%s6 + $0x80] sm:$0xff]
    %v335 = vld [vmem:[%s6 + $0x88] sm:$0xff]
    %v336 = vld [vmem:[%s6 + $0x90] sm:$0xff]
    %v337 = vld [vmem:[%s6 + $0x98] sm:$0xff]
    %v338 = vld [vmem:[%s6 + $0xa0] sm:$0xff]
    %v339 = vld [vmem:[%s6 + $0xa8] sm:$0xff]
    %v340 = vld [vmem:[%s6 + $0xb0] sm:$0xff]
    %v341 = vld [vmem:[%s6 + $0xb8] sm:$0xff]
    %v342 = vld [vmem:[%s6 + $0xc0] sm:$0xff]
    %v343 = vld [vmem:[%s6 + $0xc8] sm:$0xff]
    %v344 = vld [vmem:[%s6 + $0xd0] sm:$0xff]
    %v345 = vld [vmem:[%s6 + $0xd8] sm:$0xff]
    %v346 = vld [vmem:[%s6 + $0xe0] sm:$0xff]
    %v347 = vld [vmem:[%s6 + $0xe8] sm:$0xff]
    %v348 = vld [vmem:[%s6 + $0xf0] sm:$0xff]
    %v349 = vld [vmem:[%s6 + $0xf8] sm:$0xff]
    %v350 = vld [vmem:[%s2] sm:$0xff]
    %v351 = vld [vmem:[%s2 + $0x8] sm:$0xff]
    %352 = vmatprep.subr.mxu0 0.0
    %353 = vmatpush1.msra.mxu0 %v318
    %354 = vmatprep.subr.mxu0 0.0
    %355 = vmatpush1.msra.mxu0 %v319
    %356 = vmatprep.subr.mxu0 0.0
    %357 = vmatpush1.msra.mxu0 %v320
    %358 = vmatprep.subr.mxu0 0.0
    %359 = vmatpush1.msra.mxu0 %v321
    %360 = vmatprep.subr.mxu0 0.0
    %361 = vmatpush1.msra.mxu0 %v322
    %362 = vmatprep.subr.mxu0 0.0
    %363 = vmatpush1.msra.mxu0 %v323
    %364 = vmatprep.subr.mxu0 0.0
    %365 = vmatpush1.msra.mxu0 %v324
    %366 = vmatprep.subr.mxu0 0.0
    %367 = vmatpush1.msra.mxu0 %v325
    %368 = vmatprep.subr.mxu0 0.0
    %369 = vmatpush1.msra.mxu0 %v326
    %370 = vmatprep.subr.mxu0 0.0
    %371 = vmatpush1.msra.mxu0 %v327
    %372 = vmatprep.subr.mxu0 0.0
    %373 = vmatpush1.msra.mxu0 %v328
    %374 = vmatprep.subr.mxu0 0.0
    %375 = vmatpush1.msra.mxu0 %v329
    %376 = vmatprep.subr.mxu0 0.0
    %377 = vmatpush1.msra.mxu0 %v330
    %378 = vmatprep.subr.mxu0 0.0
    %379 = vmatpush1.msra.mxu0 %v331
    %380 = vmatprep.subr.mxu0 0.0
    %381 = vmatpush1.msra.mxu0 %v332
    %382 = vmatprep.subr.mxu0 0.0
    %383 = vmatpush1.msra.mxu0 %v333
    %384 = vmatprep.subr.mxu0 0.0
    %385 = vmatpush1.msra.mxu0 %v334
    %386 = vmatprep.subr.mxu0 0.0
    %387 = vmatpush1.msra.mxu0 %v335
    %388 = vmatprep.subr.mxu0 0.0
    %389 = vmatpush1.msra.mxu0 %v336
    %390 = vmatprep.subr.mxu0 0.0
    %391 = vmatpush1.msra.mxu0 %v337
    %392 = vmatprep.subr.mxu0 0.0
    %393 = vmatpush1.msra.mxu0 %v338
    %394 = vmatprep.subr.mxu0 0.0
    %395 = vmatpush1.msra.mxu0 %v339
    %396 = vmatprep.subr.mxu0 0.0
    %397 = vmatpush1.msra.mxu0 %v340
    %398 = vmatprep.subr.mxu0 0.0
    %399 = vmatpush1.msra.mxu0 %v341
    %400 = vmatprep.subr.mxu0 0.0
    %401 = vmatpush1.msra.mxu0 %v342
    %402 = vmatprep.subr.mxu0 0.0
    %403 = vmatpush1.msra.mxu0 %v343
    %404 = vmatprep.subr.mxu0 0.0
    %405 = vmatpush1.msra.mxu0 %v344
    %406 = vmatprep.subr.mxu0 0.0
    %407 = vmatpush1.msra.mxu0 %v345
    %408 = vmatprep.subr.mxu0 0.0
    %409 = vmatpush1.msra.mxu0 %v346
    %410 = vmatprep.subr.mxu0 0.0
    %411 = vmatpush1.msra.mxu0 %v347
    %412 = vmatprep.subr.mxu0 0.0
    %413 = vmatpush1.msra.mxu0 %v348
    %414 = vmatprep.subr.mxu0 0.0
    %415 = vmatpush1.msra.mxu0 %v349
    %416 = vmatprep.mubr.f32.mxu0 %v315
    %417 = vmatmul.mubr.f32.gmra.mrb[0].mxu0 %v314
    %v418 = vpop.f32.mrb[0].mxu0
    %v419 = vadd.f32 %v350, %v418
    %v420 = vpop.f32.mrb[0].mxu0
    %421 = vmatprep.mubr.f32.mxu0 %v317
    %422 = vmatmul.mubr.f32.gmra.mrb[0].mxu0 %v316
    %v423 = vpop.f32.mrb[0].mxu0
    %v424 = vadd.f32 %v351, %v423
    %v425 = vpop.f32.mrb[0].mxu0
    %426 = vdwg.mxu0
    %vm427 = vcmask 64512
    %v428 = vsel %vm427, %v419, -inf
    %429 = vmax.xlane.f32.xlu0 %v428
    %v430 = vpop.xlane.xlu0 %429
    %v431 = vsel %vm427, %v424, -inf
    %432 = vmax.xlane.f32.xlu0 %v431
    %v433 = vpop.xlane.xlu0 %432
    %v434 = vsub.f32 %v419, %v430
    %v435 = vsub.f32 %v424, %v433
    %v436 = vmul.f32 %v434, 1.442695
    %v437 = vpow.pop %v436
    %v438 = vmul.f32 %v435, 1.442695
    %v439 = vpow.pop %v438
    %v440 = vsel %vm427, %v437, 0.0
    %441 = vadd.xlane.f32.xlu0 %v440
    %v442 = vpop.xlane.xlu0 %441
    %v443 = vsel %vm427, %v439, 0.0
    %444 = vadd.xlane.f32.xlu0 %v443
    %v445 = vpop.xlane.xlu0 %444
    %v446 = vrcp.pop %v442
    %v447 = vrcp.pop %v445
    %v448 = vmul.f32 %v437, %v446
    %v449 = vmul.f32 %v439, %v447
    %v450 = vld [vmem:[#allocation5] sm:$0xff]
    %v451 = vld [vmem:[#allocation5 + $0x8] sm:$0xff]
    %v453 = vsel %vm427, %v448, 0
    %v456 = vsel %vm427, %v449, 0
    %458 = vmatprep.subr.mxu0 %v451
    %459 = vmatpush1.msra.mxu0 %v450
    %460 = vmatprep.subr.mxu0 0.0
    %461 = vmatpush1.msra.mxu0 0.0
    %462 = vmatprep.subr.mxu0 0.0
    %463 = vmatpush1.msra.mxu0 0.0
    %464 = vmatprep.subr.mxu0 0.0
    %465 = vmatpush1.msra.mxu0 0.0
    %466 = vmatprep.subr.mxu0 0.0
    %467 = vmatpush1.msra.mxu0 0.0
    %468 = vmatprep.subr.mxu0 0.0
    %469 = vmatpush1.msra.mxu0 0.0
    %470 = vmatprep.subr.mxu0 0.0
    %471 = vmatpush1.msra.mxu0 0.0
    %472 = vmatprep.subr.mxu0 0.0
    %473 = vmatpush1.msra.mxu0 0.0
    %474 = vmatprep.subr.mxu0 0.0
    %475 = vmatpush1.msra.mxu0 0.0
    %476 = vmatprep.subr.mxu0 0.0
    %477 = vmatpush1.msra.mxu0 0.0
    %478 = vmatprep.subr.mxu0 0.0
    %479 = vmatpush1.msra.mxu0 0.0
    %480 = vmatprep.subr.mxu0 0.0
    %481 = vmatpush1.msra.mxu0 0.0
    %482 = vmatprep.subr.mxu0 0.0
    %483 = vmatpush1.msra.mxu0 0.0
    %484 = vmatprep.subr.mxu0 0.0
    %485 = vmatpush1.msra.mxu0 0.0
    %486 = vmatprep.subr.mxu0 0.0
    %487 = vmatpush1.msra.mxu0 0.0
    %488 = vmatprep.subr.mxu0 0.0
    %489 = vmatpush1.msra.mxu0 0.0
    %490 = vmatprep.subr.mxu0 0.0
    %491 = vmatpush1.msra.mxu0 0.0
    %492 = vmatprep.subr.mxu0 0.0
    %493 = vmatpush1.msra.mxu0 0.0
    %494 = vmatprep.subr.mxu0 0.0
    %495 = vmatpush1.msra.mxu0 0.0
    %496 = vmatprep.subr.mxu0 0.0
    %497 = vmatpush1.msra.mxu0 0.0
    %498 = vmatprep.subr.mxu0 0.0
    %499 = vmatpush1.msra.mxu0 0.0
    %500 = vmatprep.subr.mxu0 0.0
    %501 = vmatpush1.msra.mxu0 0.0
    %502 = vmatprep.subr.mxu0 0.0
    %503 = vmatpush1.msra.mxu0 0.0
    %504 = vmatprep.subr.mxu0 0.0
    %505 = vmatpush1.msra.mxu0 0.0
    %506 = vmatprep.subr.mxu0 0.0
    %507 = vmatpush1.msra.mxu0 0.0
    %508 = vmatprep.subr.mxu0 0.0
    %509 = vmatpush1.msra.mxu0 0.0
    %510 = vmatprep.subr.mxu0 0.0
    %511 = vmatpush1.msra.mxu0 0.0
    %512 = vmatprep.subr.mxu0 0.0
    %513 = vmatpush1.msra.mxu0 0.0
    %514 = vmatprep.subr.mxu0 0.0
    %515 = vmatpush1.msra.mxu0 0.0
    %516 = vmatprep.subr.mxu0 0.0
    %517 = vmatpush1.msra.mxu0 0.0
    %518 = vmatprep.subr.mxu0 0.0
    %519 = vmatpush1.msra.mxu0 0.0
    %520 = vmatprep.subr.mxu0 0.0
    %521 = vmatpush1.msra.mxu0 0.0
    %522 = vmatprep.mubr.f32.mxu0 0.0
    %523 = vmatmul.mubr.f32.gmra.mrb[0].mxu0 %v453
    %v524 = vpop.f32.mrb[0].mxu0
    %v525 = vadd.f32 0.0, %v524
    %v526 = vpop.f32.mrb[0].mxu0
    %v527 = vadd.f32 0.0, %v526
    %528 = vmatprep.mubr.f32.mxu0 0.0
    %529 = vmatmul.mubr.f32.gmra.mrb[0].mxu0 %v456
    %v530 = vpop.f32.mrb[0].mxu0
    %v531 = vadd.f32 0.0, %v530
    %v532 = vpop.f32.mrb[0].mxu0
    %v533 = vadd.f32 0.0, %v532
    %534 = vdwg.mxu0
    %v535 = vmul.f32 %v525, %v59
    %v536 = vmul.f32 %v527, %v60
    %v537 = vmul.f32 %v531, %v61
    %v538 = vmul.f32 %v533, %v62
    %v539 = vld [vmem:[%s8] sm:$0xff]
    %v540 = vld [vmem:[%s8 + $0x8] sm:$0xff]
    %v541 = vld [vmem:[%s8 + $0x10] sm:$0xff]
    %v542 = vld [vmem:[%s8 + $0x18] sm:$0xff]
    %v543 = vld [vmem:[%s8 + $0x20] sm:$0xff]
    %v544 = vld [vmem:[%s8 + $0x28] sm:$0xff]
    %v545 = vld [vmem:[%s8 + $0x30] sm:$0xff]
    %v546 = vld [vmem:[%s8 + $0x38] sm:$0xff]
    %v547 = vld [vmem:[%s8 + $0x40] sm:$0xff]
    %v548 = vld [vmem:[%s8 + $0x48] sm:$0xff]
    %v549 = vld [vmem:[%s8 + $0x50] sm:$0xff]
    %v550 = vld [vmem:[%s8 + $0x58] sm:$0xff]
    %v551 = vld [vmem:[%s8 + $0x60] sm:$0xff]
    %v552 = vld [vmem:[%s8 + $0x68] sm:$0xff]
    %v553 = vld [vmem:[%s8 + $0x70] sm:$0xff]
    %v554 = vld [vmem:[%s8 + $0x78] sm:$0xff]
    %v555 = vld [vmem:[%s8 + $0x80] sm:$0xff]
    %v556 = vld [vmem:[%s8 + $0x88] sm:$0xff]
    %v557 = vld [vmem:[%s8 + $0x90] sm:$0xff]
    %v558 = vld [vmem:[%s8 + $0x98] sm:$0xff]
    %v559 = vld [vmem:[%s8 + $0xa0] sm:$0xff]
    %v560 = vld [vmem:[%s8 + $0xa8] sm:$0xff]
    %v561 = vld [vmem:[%s8 + $0xb0] sm:$0xff]
    %v562 = vld [vmem:[%s8 + $0xb8] sm:$0xff]
    %v563 = vld [vmem:[%s8 + $0xc0] sm:$0xff]
    %v564 = vld [vmem:[%s8 + $0xc8] sm:$0xff]
    %v565 = vld [vmem:[%s8 + $0xd0] sm:$0xff]
    %v566 = vld [vmem:[%s8 + $0xd8] sm:$0xff]
    %v567 = vld [vmem:[%s8 + $0xe0] sm:$0xff]
    %v568 = vld [vmem:[%s8 + $0xe8] sm:$0xff]
    %v569 = vld [vmem:[%s8 + $0xf0] sm:$0xff]
    %v570 = vld [vmem:[%s8 + $0xf8] sm:$0xff]
    %571 = vmatprep.subr.mxu0 0.0
    %572 = vmatpush1.msra.mxu0 %v539
    %573 = vmatprep.subr.mxu0 0.0
    %574 = vmatpush1.msra.mxu0 %v540
    %575 = vmatprep.subr.mxu0 0.0
    %576 = vmatpush1.msra.mxu0 %v541
    %577 = vmatprep.subr.mxu0 0.0
    %578 = vmatpush1.msra.mxu0 %v542
    %579 = vmatprep.subr.mxu0 0.0
    %580 = vmatpush1.msra.mxu0 %v543
    %581 = vmatprep.subr.mxu0 0.0
    %582 = vmatpush1.msra.mxu0 %v544
    %583 = vmatprep.subr.mxu0 0.0
    %584 = vmatpush1.msra.mxu0 %v545
    %585 = vmatprep.subr.mxu0 0.0
    %586 = vmatpush1.msra.mxu0 %v546
    %587 = vmatprep.subr.mxu0 0.0
    %588 = vmatpush1.msra.mxu0 %v547
    %589 = vmatprep.subr.mxu0 0.0
    %590 = vmatpush1.msra.mxu0 %v548
    %591 = vmatprep.subr.mxu0 0.0
    %592 = vmatpush1.msra.mxu0 %v549
    %593 = vmatprep.subr.mxu0 0.0
    %594 = vmatpush1.msra.mxu0 %v550
    %595 = vmatprep.subr.mxu0 0.0
    %596 = vmatpush1.msra.mxu0 %v551
    %597 = vmatprep.subr.mxu0 0.0
    %598 = vmatpush1.msra.mxu0 %v552
    %599 = vmatprep.subr.mxu0 0.0
    %600 = vmatpush1.msra.mxu0 %v553
    %601 = vmatprep.subr.mxu0 0.0
    %602 = vmatpush1.msra.mxu0 %v554
    %603 = vmatprep.subr.mxu0 0.0
    %604 = vmatpush1.msra.mxu0 %v555
    %605 = vmatprep.subr.mxu0 0.0
    %606 = vmatpush1.msra.mxu0 %v556
    %607 = vmatprep.subr.mxu0 0.0
    %608 = vmatpush1.msra.mxu0 %v557
    %609 = vmatprep.subr.mxu0 0.0
    %610 = vmatpush1.msra.mxu0 %v558
    %611 = vmatprep.subr.mxu0 0.0
    %612 = vmatpush1.msra.mxu0 %v559
    %613 = vmatprep.subr.mxu0 0.0
    %614 = vmatpush1.msra.mxu0 %v560
    %615 = vmatprep.subr.mxu0 0.0
    %616 = vmatpush1.msra.mxu0 %v561
    %617 = vmatprep.subr.mxu0 0.0
    %618 = vmatpush1.msra.mxu0 %v562
    %619 = vmatprep.subr.mxu0 0.0
    %620 = vmatpush1.msra.mxu0 %v563
    %621 = vmatprep.subr.mxu0 0.0
    %622 = vmatpush1.msra.mxu0 %v564
    %623 = vmatprep.subr.mxu0 0.0
    %624 = vmatpush1.msra.mxu0 %v565
    %625 = vmatprep.subr.mxu0 0.0
    %626 = vmatpush1.msra.mxu0 %v566
    %627 = vmatprep.subr.mxu0 0.0
    %628 = vmatpush1.msra.mxu0 %v567
    %629 = vmatprep.subr.mxu0 0.0
    %630 = vmatpush1.msra.mxu0 %v568
    %631 = vmatprep.subr.mxu0 0.0
    %632 = vmatpush1.msra.mxu0 %v569
    %633 = vmatprep.subr.mxu0 0.0
    %634 = vmatpush1.msra.mxu0 %v570
    %635 = vmatprep.mubr.f32.mxu0 %v536
    %636 = vmatmul.mubr.f32.gmra.mrb[0].mxu0 %v535
    %v637 = vpop.f32.mrb[0].mxu0
    %v638 = vadd.f32 0.0, %v637
    %v639 = vpop.f32.mrb[0].mxu0
    %640 = vmatprep.mubr.f32.mxu0 %v538
    %641 = vmatmul.mubr.f32.gmra.mrb[0].mxu0 %v537
    %v642 = vpop.f32.mrb[0].mxu0
    %v643 = vadd.f32 0.0, %v642
    %v644 = vpop.f32.mrb[0].mxu0
    %645 = vdwg.mxu0
    %646 = vst.msk [vmem:[#allocation7] sm:$0xff] %vm137, %v638
    %647 = vst.msk [vmem:[#allocation7 + $0x8] sm:$0xff] %vm137, %v643
    // Predicated region
    $region46: #{tpu_custom_call.1} parent=1 // pred_check
      _
    $region47: #{tpu_custom_call.1} parent=1 // pred_check_branch
      %649 = sbr.rel (0) target = $region49
    $region48: #{tpu_custom_call.1} parent=1 // pred_region
      %s651 = ssub.s32 256, 256
      %652 = vsyncadd [#allocation4], %s651
      %s653 = sshll.u32 [#allocation7], 4
      %s654 = int_to_ptr.vmem [resolvable:$true] %s653
      %659 = dma.vmem_to_hbm [thread:$0]  %s654, 256, %s9, [#allocation4], 128, 128, 8
    $region49: #{tpu_custom_call.1} parent=1 // pred_fallthru
      _
    // Predicated region
    $region50: #{tpu_custom_call.1} parent=1 // pred_check
      _
    $region51: #{tpu_custom_call.1} parent=1 // pred_check_branch
      %661 = sbr.rel (0) target = $region53
    $region52: #{tpu_custom_call.1} parent=1 // pred_region
      %662 = dma.done [#allocation4], 256
    $region53: #{tpu_custom_call.1} parent=1 // pred_fallthru
      _
    %663 = vsyncpa [#allocation3], 1
    %664 = vsyncpa [#allocation6], 1
    %665 = vsyncpa [#allocation4], 1

</llo_original>
